<compile_context>
chip_gen: v7x
topology: tpu7x:2x2x1
jax: 0.10.0
libtpu: 0.0.40
codegen_flags: <defaults>
</compile_context>

<pallas_src>
import functools

import jax
import jax.numpy as jnp
from jax import lax
from jax.experimental import pallas as pl
from jax.experimental.pallas import tpu as pltpu


def _cdiv(a, b):
    return -(-a // b)


def _round_up(a, b):
    return _cdiv(a, b) * b


def _sqdiff_kernel(pred_ref, gt_ref, out_ref, *, thw, nsteps, tail_valid):
    """Accumulate per-(batch, joint) 128-lane partial sums of (pred - gt)^2.

    pred_ref, gt_ref : (Bt, J, thw) tile in VMEM (native dtype)
    out_ref          : (Bt, J, 128) f32, resident across the HW grid axis
    """
    k = pl.program_id(1)

    @pl.when(k == 0)
    def _init():
        out_ref[...] = jnp.zeros_like(out_ref)

    acc_shape = out_ref.shape  # (Bt, J, 128)

    def accumulate(valid_lanes):
        # Fused per-chunk load/upcast/sub/square/add: keeps ~6 vregs live,
        # writes the VMEM accumulator exactly once per grid step.
        part = jnp.zeros(acc_shape, jnp.float32)
        full_chunks = valid_lanes // 128
        rem = valid_lanes % 128
        for c in range(full_chunks):
            p = pred_ref[:, :, c * 128:(c + 1) * 128].astype(jnp.float32)
            g = gt_ref[:, :, c * 128:(c + 1) * 128].astype(jnp.float32)
            d = p - g
            part = part + d * d
        if rem:
            c = full_chunks
            p = pred_ref[:, :, c * 128:(c + 1) * 128].astype(jnp.float32)
            g = gt_ref[:, :, c * 128:(c + 1) * 128].astype(jnp.float32)
            lane = lax.broadcasted_iota(jnp.int32, acc_shape, 2)
            # Compile-time-constant mask (rem is static) -> single select,
            # also neutralizes any garbage read past the true HW extent.
            d = jnp.where(lane < rem, p - g, 0.0)
            part = part + d * d
        out_ref[...] += part

    if nsteps == 1:
        accumulate(tail_valid)
    elif tail_valid == thw:
        accumulate(thw)
    else:
        last = nsteps - 1

        @pl.when(k != last)
        def _full():
            accumulate(thw)

        @pl.when(k == last)
        def _tail():
            accumulate(tail_valid)


def _choose_hw_tile(hw, rows_per_step, itemsize,
                    vmem_in_budget_bytes=12 * 1024 * 1024, max_lanes=8192):
    """Pick thw (multiple of 128) minimizing padded lanes AND step count,
    keeping (2 inputs x 2 pipeline buffers x tile) inside the input budget."""
    hw128 = _round_up(hw, 128)
    cap = vmem_in_budget_bytes // (4 * rows_per_step * max(int(itemsize), 1))
    cap = max(128, min((cap // 128) * 128, max_lanes, hw128))
    nsteps = _cdiv(hw128, cap)
    thw = _round_up(_cdiv(hw128, nsteps), 128)
    return thw


def joints_ohkm_mse_loss(output, target, target_weight, *, topk=8,
                         use_target_weight=True, hw_tile=None):
    """output/target: (B, J, H, W); target_weight: (B, J, 1) or (B, J)."""
    B, J, H, W = output.shape
    if topk > J:
        raise ValueError(f"topk={topk} must be <= num_joints={J}")
    HW = H * W

    pred = output.reshape(B, J, HW)   # native dtype; bf16 halves HBM traffic
    gt = target.reshape(B, J, HW)

    # Batch split -> leading "parallel" grid axis (uses both v7x TensorCores).
    if B >= 2 and B % 2 == 0:
        nb, Bt = 2, B // 2
    else:
        nb, Bt = 1, B

    itemsize = jnp.dtype(pred.dtype).itemsize
    if hw_tile is None:
        thw = _choose_hw_tile(HW, Bt * J, itemsize)
    else:
        assert hw_tile % 128 == 0, "hw_tile must be a multiple of 128"
        thw = hw_tile
    nsteps = _cdiv(HW, thw)
    tail_valid = HW - (nsteps - 1) * thw   # static, in [1, thw]

    kernel = functools.partial(_sqdiff_kernel, thw=thw, nsteps=nsteps,
                               tail_valid=tail_valid)

    cost = pl.CostEstimate(
        flops=3 * B * J * HW,
        transcendentals=0,
        bytes_accessed=2 * B * J * HW * itemsize + B * J * 128 * 4,
    )

    sq_sum = pl.pallas_call(
        kernel,
        out_shape=jax.ShapeDtypeStruct((B, J, 128), jnp.float32),
        grid=(nb, nsteps),
        in_specs=[
            pl.BlockSpec((Bt, J, thw), lambda b, k: (b, 0, k)),
            pl.BlockSpec((Bt, J, thw), lambda b, k: (b, 0, k)),
        ],
        out_specs=pl.BlockSpec((Bt, J, 128), lambda b, k: (b, 0, 0)),
        compiler_params=pltpu.CompilerParams(
            dimension_semantics=("parallel", "arbitrary"),
            vmem_limit_bytes=32 * 1024 * 1024,
        ),
        cost_estimate=cost,
    )(pred, gt)

    # Tiny epilogue on B*J values in plain JAX (keeps the kernel output
    # lane-dense and the batch axis megacore-shardable).
    row_sum = jnp.sum(sq_sum, axis=-1)                       # (B, J)
    if use_target_weight:
        w = target_weight.reshape(B, J).astype(jnp.float32)
    else:
        w = jnp.ones((B, J), jnp.float32)
    # (pred*w - gt*w)^2 == w^2 * (pred - gt)^2  (exact for 0/1 weights)
    loss = (0.5 / float(HW)) * (w * w) * row_sum             # (B, J)
    topv = lax.top_k(loss, topk)[0]                          # (B, topk)
    return jnp.mean(jnp.sum(topv, axis=-1) / topk)


def _reference(output, target, target_weight, topk=8):
    B, J = output.shape[:2]
    pred = output.reshape(B, J, -1).astype(jnp.float32)
    gt = target.reshape(B, J, -1).astype(jnp.float32)
    w = target_weight.reshape(B, J, 1).astype(jnp.float32)
    loss = 0.5 * jnp.mean((pred * w - gt * w) ** 2, axis=-1)  # (B, J)
    topv = lax.top_k(loss, topk)[0]
    return jnp.mean(jnp.sum(topv, axis=-1) / topk)


if __name__ == "__main__":
    key = jax.random.PRNGKey(0)
    k1, k2, k3, k4, k5, k6 = jax.random.split(key, 6)

    # Case 1: canonical small shape (single HW step, batch-parallel axis of 2).
    B, J, H, W = 2, 16, 16, 16     # num_joints >= topk=8
    output = jax.random.normal(k1, (B, J, H, W), jnp.float32)
    target = jax.random.normal(k2, (B, J, H, W), jnp.float32)
    tw = (jax.random.uniform(k3, (B, J, 1)) > 0.2).astype(jnp.float32)
    loss = jax.block_until_ready(joints_ohkm_mse_loss(output, target, tw, topk=8))
    ref = _reference(output, target, tw, topk=8)
    assert jnp.allclose(loss, ref, rtol=1e-4, atol=1e-6), (loss, ref)

    # Case 2: HW=480 with a forced 128-lane tile -> 4 grid steps and in-kernel
    # tail-lane masking (no host-side padding of the heatmaps).
    B2, J2, H2, W2 = 2, 16, 24, 20
    o2 = jax.random.normal(k4, (B2, J2, H2, W2), jnp.float32)
    t2 = jax.random.normal(k5, (B2, J2, H2, W2), jnp.float32)
    w2 = (jax.random.uniform(k6, (B2, J2, 1)) > 0.3).astype(jnp.float32)
    loss2 = jax.block_until_ready(
        joints_ohkm_mse_loss(o2, t2, w2, topk=8, hw_tile=128))
    ref2 = _reference(o2, t2, w2, topk=8)
    assert jnp.allclose(loss2, ref2, rtol=1e-4, atol=1e-6), (loss2, ref2)

    # Case 3: odd batch (single batch block), bf16 heatmaps, HW=323 (not a
    # multiple of 128) with auto tiling -> masked partial chunk, single step.
    B3, J3, H3, W3 = 3, 12, 17, 19
    o3 = jax.random.normal(k2, (B3, J3, H3, W3), jnp.bfloat16)
    t3 = jax.random.normal(k3, (B3, J3, H3, W3), jnp.bfloat16)
    w3 = (jax.random.uniform(k1, (B3, J3, 1)) > 0.3).astype(jnp.float32)
    loss3 = jax.block_until_ready(joints_ohkm_mse_loss(o3, t3, w3, topk=8))
    ref3 = _reference(o3, t3, w3, topk=8)
    assert jnp.allclose(loss3, ref3, rtol=1e-4, atol=1e-5), (loss3, ref3)

    print("KERNEL_OK")
</pallas_src>

<mosaic_0001>
module attributes {stable_mosaic.version = 11 : i64} {
  func.func @_sqdiff_kernel(%arg0: i32, %arg1: i32, %arg2: memref<1x16x256xf32, #tpu.memory_space<vmem>>, %arg3: memref<1x16x256xf32, #tpu.memory_space<vmem>>, %arg4: memref<1x16x128xf32, #tpu.memory_space<vmem>>) attributes {dimension_semantics = [#tpu.dimension_semantics<parallel>, #tpu.dimension_semantics<arbitrary>], iteration_bounds = array<i64: 2, 1>, scalar_prefetch = 0 : i64, scratch_operands = 0 : i64, tpu.core_type = #tpu.core_type<tc>, window_params = [{transform_indices = @transform_0, window_bounds = array<i64: 1, 16, 256>}, {transform_indices = @transform_1, window_bounds = array<i64: 1, 16, 256>}, {transform_indices = @transform_2, window_bounds = array<i64: 1, 16, 128>}]} {
    %c0_i32 = arith.constant 0 : i32
    %0 = arith.cmpi eq, %arg1, %c0_i32 : i32
    %1 = arith.extui %0 : i1 to i32
    %c0_i32_0 = arith.constant 0 : i32
    %2 = arith.cmpi ne, %1, %c0_i32_0 : i32
    scf.if %2 {
      %cst_17 = arith.constant 0.000000e+00 : f32
      %17 = vector.broadcast %cst_17 : f32 to vector<1x16x128xf32>
      %c0_18 = arith.constant 0 : index
      %c0_19 = arith.constant 0 : index
      %c0_20 = arith.constant 0 : index
      %18 = vector.load %arg4[%c0_18, %c0_19, %c0_20] : memref<1x16x128xf32, #tpu.memory_space<vmem>>, vector<1x16x128xf32>
      tpu.vector_store %arg4[%c0_18, %c0_19, %c0_20], %17 {strides = array<i32>} : memref<1x16x128xf32, #tpu.memory_space<vmem>>, vector<1x16x128xf32>,
    } else {
    }
    %cst = arith.constant 0.000000e+00 : f32
    %3 = vector.broadcast %cst : f32 to vector<1x16x128xf32>
    %c0 = arith.constant 0 : index
    %c0_1 = arith.constant 0 : index
    %c0_2 = arith.constant 0 : index
    %4 = vector.load %arg2[%c0, %c0_1, %c0_2] : memref<1x16x256xf32, #tpu.memory_space<vmem>>, vector<1x16x128xf32>
    %c0_3 = arith.constant 0 : index
    %c0_4 = arith.constant 0 : index
    %c0_5 = arith.constant 0 : index
    %5 = vector.load %arg3[%c0_3, %c0_4, %c0_5] : memref<1x16x256xf32, #tpu.memory_space<vmem>>, vector<1x16x128xf32>
    %6 = arith.subf %4, %5 : vector<1x16x128xf32>
    %7 = arith.mulf %6, %6 : vector<1x16x128xf32>
    %8 = arith.addf %3, %7 : vector<1x16x128xf32>
    %c0_6 = arith.constant 0 : index
    %c0_7 = arith.constant 0 : index
    %c128 = arith.constant 128 : index
    %9 = vector.load %arg2[%c0_6, %c0_7, %c128] : memref<1x16x256xf32, #tpu.memory_space<vmem>>, vector<1x16x128xf32>
    %c0_8 = arith.constant 0 : index
    %c0_9 = arith.constant 0 : index
    %c128_10 = arith.constant 128 : index
    %10 = vector.load %arg3[%c0_8, %c0_9, %c128_10] : memref<1x16x256xf32, #tpu.memory_space<vmem>>, vector<1x16x128xf32>
    %11 = arith.subf %9, %10 : vector<1x16x128xf32>
    %12 = arith.mulf %11, %11 : vector<1x16x128xf32>
    %13 = arith.addf %8, %12 : vector<1x16x128xf32>
    %c0_11 = arith.constant 0 : index
    %c0_12 = arith.constant 0 : index
    %c0_13 = arith.constant 0 : index
    %14 = vector.load %arg4[%c0_11, %c0_12, %c0_13] : memref<1x16x128xf32, #tpu.memory_space<vmem>>, vector<1x16x128xf32>
    %15 = arith.addf %14, %13 : vector<1x16x128xf32>
    %c0_14 = arith.constant 0 : index
    %c0_15 = arith.constant 0 : index
    %c0_16 = arith.constant 0 : index
    %16 = vector.load %arg4[%c0_14, %c0_15, %c0_16] : memref<1x16x128xf32, #tpu.memory_space<vmem>>, vector<1x16x128xf32>
    tpu.vector_store %arg4[%c0_14, %c0_15, %c0_16], %15 {strides = array<i32>} : memref<1x16x128xf32, #tpu.memory_space<vmem>>, vector<1x16x128xf32>,
    return
  }
  func.func @transform_0(%arg0: i32, %arg1: i32) -> (i32, i32, i32) {
    %c0_i32 = arith.constant 0 : i32
    %c0_i32_0 = arith.constant 0 : i32
    return %arg0, %c0_i32, %arg1 : i32, i32, i32
  }
  func.func @transform_1(%arg0: i32, %arg1: i32) -> (i32, i32, i32) {
    %c0_i32 = arith.constant 0 : i32
    %c0_i32_0 = arith.constant 0 : i32
    return %arg0, %c0_i32, %arg1 : i32, i32, i32
  }
  func.func @transform_2(%arg0: i32, %arg1: i32) -> (i32, i32, i32) {
    %c0_i32 = arith.constant 0 : i32
    %c0_i32_0 = arith.constant 0 : i32
    %c0_i32_1 = arith.constant 0 : i32
    return %arg0, %c0_i32, %c0_i32_0 : i32, i32, i32
  }
}

</mosaic_0001>

<llo_original>
// kernel: tpu_custom_call.1
$region0: #{tpu_custom_call.1}
  #allocation0 [shape = 'u32[]', space=smem, size = 0x4, offset = 0x4, fixed_abs, tag = 'smem constant byte address 0x4 - core index']
  #allocation1 [shape = 'u32[144,128]{1,0:T(1,128)}', space=vmem, size = 0x12000, scoped, tag = 'internal scratch']
  %s0 = inlined_call_operand.hbm [shape: f32[2,16,256], index: 0, kind: input, shape index: {}]
  %s1 = inlined_call_operand.hbm [shape: f32[2,16,256], index: 1, kind: input, shape index: {}]
  %s2 = inlined_call_operand.hbm [shape: f32[2,16,128], index: 2, kind: output, shape index: {}]
  %s3 = sld [smem:[#allocation0]]
  $region53: #{tpu_custom_call.1} parent=0
    _
  %s5 = ssub.s32 1, %s3
  %s6 = scalar_select 0, %s5, %s3
  $region1: #{tpu_custom_call.1} parent=0
    #allocation2 [shape = 'u8[32768]{0}', space=vmem, size = 0x8000, scoped, tag = 'input window, operand 0']
    #allocation3 [shape = 's32[2]{0}', space=sflag, size = 0x8, scoped, tag = 'scoped memory for tpu_custom_call.1']
    #allocation4 [shape = 's32[2]{0}', space=sflag, size = 0x8, scoped, tag = 'scoped memory for tpu_custom_call.1']
    #allocation5 [shape = 'u8[32768]{0}', space=vmem, size = 0x8000, scoped, tag = 'input window, operand 1']
    #allocation6 [shape = 's32[2]{0}', space=sflag, size = 0x8, scoped, tag = 'scoped memory for tpu_custom_call.1']
    #allocation7 [shape = 'u8[16384]{0}', space=vmem, size = 0x4000, scoped, tag = 'output window, operand 0']
    %7 = vsyncpa [#allocation3], 0
    %s8 = scalar_lea.sflag [#allocation3], 1
    %9 = vsyncpa %s8, 0
    %10 = vsyncpa [#allocation6], 0
    %s11 = scalar_lea.sflag [#allocation6], 1
    %12 = vsyncpa %s11, 0
    %13 = vsyncpa [#allocation4], 0
    %s14 = scalar_lea.sflag [#allocation4], 1
    %15 = vsyncpa %s14, 0
    loop: start=0, step=1, limit=4
    $region2: #{tpu_custom_call.1} parent=1 // loop_pre_header
      _
    $region3: #{tpu_custom_call.1} parent=1 // loop_header
      %s17 = sphi 0, %s21
      %p18 = scmp.ge.s32.totalorder %s17, 4
      %s24 = sphi 0, %s36
      %s25 = sphi 0, %s32
      %s26 = sphi 0, %s24
      %s27 = sphi 0, %s25
      %s28 = sphi 0, %s26
      %s29 = sphi 0, %s27
      %s41 = sphi 0, %s43
      %s44 = sphi 0, %s41
      %s45 = sphi 0, %s44
      %s61 = sphi 0, %s45
      %s69 = sphi 0, %s71
      %s72 = sphi 0, %s69
      %s73 = sphi 0, %s72
      %s89 = sphi 0, %s73
      %s95 = sphi 0, %s97
      %s98 = sphi 0, %s95
      %s99 = sphi 0, %s98
      %s115 = sphi 0, %s99
    $region4: #{tpu_custom_call.1} parent=1 // loop_header_branch
      %20 = sbr.rel (%p18) target = $region8
    $region5: #{tpu_custom_call.1} parent=1 // loop_body
      %s22 = ssub.s32 %s17, 1
      %s23 = ssub.s32 %s17, 2
      %s30 = sadd.s32 1, %s25
      %p31 = scmp.ge.s32.totalorder %s30, 1
      %s32 = scalar_select %p31, 0, %s30
      %s33 = sadd.s32 1, %s24
      %s34 = scalar_select %p31, %s33, %s24
      %p35 = scmp.ge.s32.totalorder %s34, 2
      %s36 = scalar_select %p35, 0, %s34
      %s37 = ssub.s32 %s24, %s36
      %s38 = ssub.s32 %s25, %s32
      %s39 = sor.u32 %s37, %s38
      %p40 = scmp.eq.s32.totalorder %s39, 0
      %s42 = sadd.s32 %s41, 1
      %s43 = scalar_select %p40, %s41, %s42
      %p46 = pneg %p40
      %p47 = scmp.eq.s32.totalorder %s17, 1
      %p48 = por %p46, %p47
      %p49 = scmp.ne.s32.totalorder %s41, %s44
      %p50 = scmp.eq.s32.totalorder %s17, 0
      %p51 = por %p49, %p50
      %p52 = scmp.ne.s32.totalorder %s41, %s44
      %p53 = scmp.eq.s32.totalorder %s22, 1
      %p54 = por %p52, %p53
      %p55 = scmp.ne.s32.totalorder %s44, %s45
      %p56 = scmp.eq.s32.totalorder %s22, 0
      %p57 = por %p55, %p56
      %p58 = scmp.ne.s32.totalorder %s44, %s45
      %p59 = scmp.eq.s32.totalorder %s23, 1
      %p60 = por %p58, %p59
      %p62 = scmp.ne.s32.totalorder %s45, %s61
      %p63 = scmp.eq.s32.totalorder %s23, 0
      %p64 = por %p62, %p63
      %s65 = ssub.s32 %s24, %s36
      %s66 = ssub.s32 %s25, %s32
      %s67 = sor.u32 %s65, %s66
      %p68 = scmp.eq.s32.totalorder %s67, 0
      %s70 = sadd.s32 %s69, 1
      %s71 = scalar_select %p68, %s69, %s70
      %p74 = pneg %p68
      %p75 = scmp.eq.s32.totalorder %s17, 1
      %p76 = por %p74, %p75
      %p77 = scmp.ne.s32.totalorder %s69, %s72
      %p78 = scmp.eq.s32.totalorder %s17, 0
      %p79 = por %p77, %p78
      %p80 = scmp.ne.s32.totalorder %s69, %s72
      %p81 = scmp.eq.s32.totalorder %s22, 1
      %p82 = por %p80, %p81
      %p83 = scmp.ne.s32.totalorder %s72, %s73
      %p84 = scmp.eq.s32.totalorder %s22, 0
      %p85 = por %p83, %p84
      %p86 = scmp.ne.s32.totalorder %s72, %s73
      %p87 = scmp.eq.s32.totalorder %s23, 1
      %p88 = por %p86, %p87
      %p90 = scmp.ne.s32.totalorder %s73, %s89
      %p91 = scmp.eq.s32.totalorder %s23, 0
      %p92 = por %p90, %p91
      %s93 = ssub.s32 %s24, %s36
      %p94 = scmp.eq.s32.totalorder %s93, 0
      %s96 = sadd.s32 %s95, 1
      %s97 = scalar_select %p94, %s95, %s96
      %p100 = pneg %p94
      %p101 = scmp.eq.s32.totalorder %s17, 1
      %p102 = por %p100, %p101
      %p103 = scmp.ne.s32.totalorder %s95, %s98
      %p104 = scmp.eq.s32.totalorder %s17, 0
      %p105 = por %p103, %p104
      %p106 = scmp.ne.s32.totalorder %s95, %s98
      %p107 = scmp.eq.s32.totalorder %s22, 1
      %p108 = por %p106, %p107
      %p109 = scmp.ne.s32.totalorder %s98, %s99
      %p110 = scmp.eq.s32.totalorder %s22, 0
      %p111 = por %p109, %p110
      %p112 = scmp.ne.s32.totalorder %s98, %s99
      %p113 = scmp.eq.s32.totalorder %s23, 1
      %p114 = por %p112, %p113
      %p116 = scmp.ne.s32.totalorder %s99, %s115
      %p117 = scmp.eq.s32.totalorder %s23, 0
      %p118 = por %p116, %p117
      %p119 = scmp.le.s32.totalorder 1, %s17
      %p120 = scmp.lt.s32.totalorder %s17, 3
      %p121 = pnand %p119, %p120
      %p122 = pneg %p121
      // Predicated region
      $region9: #{tpu_custom_call.1} parent=5 // pred_check
        _
      $region10: #{tpu_custom_call.1} parent=5 // pred_check_branch
        %124 = sbr.rel (%p121) target = $region12
      $region11: #{tpu_custom_call.1} parent=5 // pred_region
        %s125 = ssub.s32 %s17, 1
      $region12: #{tpu_custom_call.1} parent=5 // pred_fallthru
        _
      %p126 = scmp.lt.s32.totalorder %s17, 2
      // Predicated region
      $region13: #{tpu_custom_call.1} parent=5 // pred_check
        %p127 = pneg %p126
      $region14: #{tpu_custom_call.1} parent=5 // pred_check_branch
        %129 = sbr.rel (%p127) target = $region16
      $region15: #{tpu_custom_call.1} parent=5 // pred_region
        // Predicated region
        $region17: #{tpu_custom_call.1} parent=15 // pred_check
          %p130 = pneg %p51
        $region18: #{tpu_custom_call.1} parent=15 // pred_check_branch
          %132 = sbr.rel (%p130) target = $region20
        $region19: #{tpu_custom_call.1} parent=15 // pred_region
          %s133 = sand.u32 %s41, 1
          %s134 = scalar_lea.sflag [#allocation3], %s133
          %s135 = sand.u32 %s41, 1
          %s136 = smul.addr %s135, 32
          %s137 = scalar_lea.vmem [#allocation2], %s136
          %s138 = smul.u32 2, %s25
          %s140 = ssub.s32 512, 512
          %141 = vsyncadd %s134, %s140
          %s142 = smul.addr %s24, 4
          %s143 = sadd.s32 %s138, %s142
          %s144 = smul.addr %s143, 128
          %s145 = scalar_lea.hbm %s0, %s144
          %s146 = sshll.u32 %s137, 4
          %s147 = int_to_ptr.vmem [resolvable:$true] %s146
          %152 = dma.hbm_to_vmem [thread:$0]  %s145, 512, %s147, %s134, 256, 256, 16
        $region20: #{tpu_custom_call.1} parent=15 // pred_fallthru
          _
        // Predicated region
        $region21: #{tpu_custom_call.1} parent=15 // pred_check
          %p153 = pneg %p79
        $region22: #{tpu_custom_call.1} parent=15 // pred_check_branch
          %155 = sbr.rel (%p153) target = $region24
        $region23: #{tpu_custom_call.1} parent=15 // pred_region
          %s156 = sand.u32 %s69, 1
          %s157 = scalar_lea.sflag [#allocation6], %s156
          %s158 = sand.u32 %s69, 1
          %s159 = smul.addr %s158, 32
          %s160 = scalar_lea.vmem [#allocation5], %s159
          %s161 = smul.u32 2, %s25
          %s163 = ssub.s32 512, 512
          %164 = vsyncadd %s157, %s163
          %s165 = smul.addr %s24, 4
          %s166 = sadd.s32 %s161, %s165
          %s167 = smul.addr %s166, 128
          %s168 = scalar_lea.hbm %s1, %s167
          %s169 = sshll.u32 %s160, 4
          %s170 = int_to_ptr.vmem [resolvable:$true] %s169
          %175 = dma.hbm_to_vmem [thread:$0]  %s168, 512, %s170, %s157, 256, 256, 16
        $region24: #{tpu_custom_call.1} parent=15 // pred_fallthru
          _
      $region16: #{tpu_custom_call.1} parent=5 // pred_fallthru
        _
      %p176 = scmp.le.s32.totalorder 1, %s17
      %p177 = scmp.lt.s32.totalorder %s17, 3
      %p178 = pnand %p176, %p177
      %p179 = pneg %p178
      // Predicated region
      $region25: #{tpu_custom_call.1} parent=5 // pred_check
        _
      $region26: #{tpu_custom_call.1} parent=5 // pred_check_branch
        %181 = sbr.rel (%p178) target = $region28
      $region27: #{tpu_custom_call.1} parent=5 // pred_region
        %s182 = ssub.s32 %s17, 1
        %s183 = sand.u32 %s44, 1
        %s184 = scalar_lea.sflag [#allocation3], %s183
        %s185 = sand.u32 %s44, 1
        %s186 = smul.addr %s185, 32
        %s187 = scalar_lea.vmem [#allocation2], %s186
        // Predicated region
        $region29: #{tpu_custom_call.1} parent=27 // pred_check
          %p188 = pneg %p57
        $region30: #{tpu_custom_call.1} parent=27 // pred_check_branch
          %190 = sbr.rel (%p188) target = $region32
        $region31: #{tpu_custom_call.1} parent=27 // pred_region
          %191 = dma.done %s184, 512
        $region32: #{tpu_custom_call.1} parent=27 // pred_fallthru
          _
        %s192 = sand.u32 %s72, 1
        %s193 = scalar_lea.sflag [#allocation6], %s192
        %s194 = sand.u32 %s72, 1
        %s195 = smul.addr %s194, 32
        %s196 = scalar_lea.vmem [#allocation5], %s195
        // Predicated region
        $region33: #{tpu_custom_call.1} parent=27 // pred_check
          %p197 = pneg %p85
        $region34: #{tpu_custom_call.1} parent=27 // pred_check_branch
          %199 = sbr.rel (%p197) target = $region36
        $region35: #{tpu_custom_call.1} parent=27 // pred_region
          %200 = dma.done %s193, 512
        $region36: #{tpu_custom_call.1} parent=27 // pred_fallthru
          _
        %s201 = sand.u32 %s44, 1
        %s202 = scalar_lea.sflag [#allocation3], %s201
        %s203 = sand.u32 %s44, 1
        %s204 = smul.addr %s203, 32
        %s205 = scalar_lea.vmem [#allocation2], %s204
        %p206 = pneg %p57
        %p207 = pneg %p54
        %s208 = sand.u32 %s72, 1
        %s209 = scalar_lea.sflag [#allocation6], %s208
        %s210 = sand.u32 %s72, 1
        %s211 = smul.addr %s210, 32
        %s212 = scalar_lea.vmem [#allocation5], %s211
        %p213 = pneg %p85
        %p214 = pneg %p82
        %p215 = pneg %p111
        %p216 = pneg %p108
        %s217 = sand.u32 %s98, 1
        %s218 = scalar_lea.sflag [#allocation4], %s217
        %s219 = sand.u32 %s98, 1
        %s220 = smul.addr %s219, 16
        %s221 = scalar_lea.vmem [#allocation7], %s220
        %s222 = smul.u32 2, %s27
        %s223 = smul.u32 2, %s27
        %p224 = scmp.eq.s32.totalorder %s27, 0
        // Predicated region
        $region37: #{tpu_custom_call.1} parent=27 // pred_check
          %p225 = pneg %p224
        $region38: #{tpu_custom_call.1} parent=27 // pred_check_branch
          %227 = sbr.rel (%p225) target = $region40
        $region39: #{tpu_custom_call.1} parent=27 // pred_region
          %228 = vst [vmem:[%s221] sm:$0xff] 0.0
          %229 = vst [vmem:[%s221 + $0x8] sm:$0xff] 0.0
        $region40: #{tpu_custom_call.1} parent=27 // pred_fallthru
          _
        %v230 = vld [vmem:[%s187] sm:$0xff]
        %v231 = vld [vmem:[%s187 + $0x10] sm:$0xff]
        %v232 = vld [vmem:[%s196] sm:$0xff]
        %v233 = vld [vmem:[%s196 + $0x10] sm:$0xff]
        %v234 = vsub.f32 %v230, %v232
        %v235 = vsub.f32 %v231, %v233
        %v236 = vmul.f32 %v234, %v234
        %v237 = vmul.f32 %v235, %v235
        %v238 = vadd.f32 %v236, 0.0
        %v239 = vadd.f32 %v237, 0.0
        %v240 = vld [vmem:[%s187 + $0x8] sm:$0xff]
        %v241 = vld [vmem:[%s187 + $0x18] sm:$0xff]
        %v242 = vld [vmem:[%s196 + $0x8] sm:$0xff]
        %v243 = vld [vmem:[%s196 + $0x18] sm:$0xff]
        %v244 = vsub.f32 %v240, %v242
        %v245 = vsub.f32 %v241, %v243
        %v246 = vmul.f32 %v244, %v244
        %v247 = vmul.f32 %v245, %v245
        %v248 = vadd.f32 %v238, %v246
        %v249 = vadd.f32 %v239, %v247
        %v250 = vld [vmem:[%s221] sm:$0xff]
        %v251 = vld [vmem:[%s221 + $0x8] sm:$0xff]
        %v252 = vadd.f32 %v250, %v248
        %v253 = vadd.f32 %v251, %v249
        %254 = vst [vmem:[%s221] sm:$0xff] %v252
        %255 = vst [vmem:[%s221 + $0x8] sm:$0xff] %v253
        %s256 = sand.u32 %s98, 1
        %s257 = scalar_lea.sflag [#allocation4], %s256
        %s258 = sand.u32 %s98, 1
        %s259 = smul.addr %s258, 16
        %s260 = scalar_lea.vmem [#allocation7], %s259
        // Predicated region
        $region41: #{tpu_custom_call.1} parent=27 // pred_check
          %p261 = pneg %p108
        $region42: #{tpu_custom_call.1} parent=27 // pred_check_branch
          %263 = sbr.rel (%p261) target = $region44
        $region43: #{tpu_custom_call.1} parent=27 // pred_region
          %s265 = ssub.s32 256, 256
          %266 = vsyncadd %s257, %s265
          %s267 = smul.addr %s26, 2
          %s268 = smul.addr %s267, 128
          %s269 = scalar_lea.hbm %s2, %s268
          %s270 = sshll.u32 %s260, 4
          %s271 = int_to_ptr.vmem [resolvable:$true] %s270
          %276 = dma.vmem_to_hbm [thread:$0]  %s271, 256, %s269, %s257, 128, 128, 8
        $region44: #{tpu_custom_call.1} parent=27 // pred_fallthru
          _
      $region28: #{tpu_custom_call.1} parent=5 // pred_fallthru
        _
      %p277 = scmp.le.s32.totalorder 2, %s17
      // Predicated region
      $region45: #{tpu_custom_call.1} parent=5 // pred_check
        %p278 = pneg %p277
      $region46: #{tpu_custom_call.1} parent=5 // pred_check_branch
        %280 = sbr.rel (%p278) target = $region48
      $region47: #{tpu_custom_call.1} parent=5 // pred_region
        %s281 = ssub.s32 %s17, 2
        // Predicated region
        $region49: #{tpu_custom_call.1} parent=47 // pred_check
          %p282 = pneg %p114
        $region50: #{tpu_custom_call.1} parent=47 // pred_check_branch
          %284 = sbr.rel (%p282) target = $region52
        $region51: #{tpu_custom_call.1} parent=47 // pred_region
          %s285 = sand.u32 %s99, 1
          %s286 = scalar_lea.sflag [#allocation4], %s285
          %s287 = sand.u32 %s99, 1
          %s288 = smul.addr %s287, 16
          %s289 = scalar_lea.vmem [#allocation7], %s288
          %290 = dma.done %s286, 256
        $region52: #{tpu_custom_call.1} parent=47 // pred_fallthru
          _
      $region48: #{tpu_custom_call.1} parent=5 // pred_fallthru
        _
    $region6: #{tpu_custom_call.1} parent=1 // loop_footer
      %s21 = sadd.s32 1, %s17
    $region7: #{tpu_custom_call.1} parent=1 // loop_footer_branch
      %16 = sbr.rel target = $region3
    $region8: #{tpu_custom_call.1} parent=1 // loop_exit
      _
    %291 = vsyncpa [#allocation3], 1
    %s292 = scalar_lea.sflag [#allocation3], 1
    %293 = vsyncpa %s292, 1
    %294 = vsyncpa [#allocation6], 1
    %s295 = scalar_lea.sflag [#allocation6], 1
    %296 = vsyncpa %s295, 1
    %297 = vsyncpa [#allocation4], 1
    %s298 = scalar_lea.sflag [#allocation4], 1
    %299 = vsyncpa %s298, 1

</llo_original>
